<compile_context>
chip_gen: v7x
topology: tpu7x:2x2x1
jax: 0.10.0
libtpu: 0.0.40
codegen_flags: <defaults>
</compile_context>

<pallas_src>
import math
import functools

import jax
import jax.numpy as jnp
from jax.experimental import pallas as pl
from jax.experimental.pallas import tpu as pltpu

DROPOUT_P = 0.2  # module-level `dropout = 0.2` in the reference script


def _pe_dropout_kernel(seed_ref, x_ref, pe_ref, o_ref, *,
                       n_batch, apply_dropout, keep_prob):
    """seed_ref: SMEM (1,) int32 scalar-prefetch.
       x_ref:  VMEM (TS, N*E)   o_ref: VMEM (TS, N*E)   pe_ref: VMEM (TS, E)."""
    x = x_ref[...]                                   # (TS, N*E)
    pe = pe_ref[...]                                 # (TS, E)
    if n_batch == 1:
        pe_rep = pe
    else:
        # replicate pe across the batch copies that live side-by-side in the
        # lane dimension (lane-axis concat; N is a static Python int)
        pe_rep = jnp.concatenate([pe] * n_batch, axis=1)   # (TS, N*E)
    y = x + pe_rep

    if apply_dropout:
        # Per-tile decorrelated seed (fixes correlated-mask bug when tiled).
        pid = pl.program_id(0)
        seed = (seed_ref[0].astype(jnp.uint32)
                + pid.astype(jnp.uint32) * jnp.uint32(0x9E3779B9))
        # Counter-based hash: distinct (row, col) per element, avalanched.
        r = jax.lax.broadcasted_iota(jnp.int32, y.shape, 0).astype(jnp.uint32)
        c = jax.lax.broadcasted_iota(jnp.int32, y.shape, 1).astype(jnp.uint32)
        h = (r * jnp.uint32(0x85EBCA77)) ^ (c * jnp.uint32(0xC2B2AE3D)) ^ seed
        h = h ^ (h >> jnp.uint32(16))
        h = h * jnp.uint32(0x7FEB352D)
        h = h ^ (h >> jnp.uint32(15))
        h = h * jnp.uint32(0x846CA68B)
        h = h ^ (h >> jnp.uint32(16))
        # Compare top 24 bits as a signed int (avoids unsigned-compare lowering).
        h24 = (h >> jnp.uint32(8)).astype(jnp.int32)
        keep = h24 < jnp.int32(int(keep_prob * (1 << 24)))
        y = jnp.where(keep, y * jnp.float32(1.0 / keep_prob), jnp.zeros_like(y))

    o_ref[...] = y.astype(o_ref.dtype)


def make_pe_table(d_model, max_len=5000, dtype=jnp.float32):
    """Deterministic sinusoidal table, identical to the PyTorch __init__."""
    position = jnp.arange(max_len, dtype=jnp.float32)[:, None]           # (L, 1)
    div_term = jnp.exp(
        jnp.arange(0, d_model, 2, dtype=jnp.float32)
        * (-math.log(10000.0) / d_model)
    )                                                                    # (E/2,)
    pe = jnp.zeros((max_len, d_model), dtype=jnp.float32)
    pe = pe.at[:, 0::2].set(jnp.sin(position * div_term))
    pe = pe.at[:, 1::2].set(jnp.cos(position * div_term))
    # unsqueeze(0).transpose(0,1)  ->  (max_len, 1, d_model)
    return pe[:, None, :].astype(dtype)


def _choose_tile_s(S, row_bytes, target_bytes=1 << 20):
    """Pick a seq-tile: multiple of 8 (sublane constraint), divides S, ~<=1 MiB
    per x block, and >=2 grid steps when possible (megacore sharding on v7x)."""
    if S % 8 != 0:
        return S                       # single full block (block dim == array dim is legal)
    divisors = [t for t in range(8, S + 1, 8) if S % t == 0]
    fitting = [t for t in divisors if t * row_bytes <= target_bytes and S // t >= 2]
    if fitting:
        return max(fitting)
    fitting = [t for t in divisors if t * row_bytes <= target_bytes]
    return max(fitting) if fitting else 8


def positional_encoding_forward(x, pe, *, seed=0, training=True, dropout_p=DROPOUT_P):
    """x: (S, N, E).  pe: (max_len, 1, E).  Returns (S, N, E)."""
    S, N, E = x.shape
    NE = N * E
    x2 = x.reshape(S, NE)                 # free, row-major contiguous -> lane-dense slab
    pe_slice = pe[:S, 0, :]               # (S, E): each pe row is DMA'd exactly once

    row_bytes = NE * x.dtype.itemsize
    ts = _choose_tile_s(S, row_bytes)
    grid = (S // ts,)

    seed_arr = jnp.asarray([seed], dtype=jnp.int32)
    kernel = functools.partial(
        _pe_dropout_kernel,
        n_batch=N,
        apply_dropout=bool(training and dropout_p > 0.0),
        keep_prob=1.0 - dropout_p,
    )

    out2 = pl.pallas_call(
        kernel,
        out_shape=jax.ShapeDtypeStruct((S, NE), x.dtype),
        grid_spec=pltpu.PrefetchScalarGridSpec(
            num_scalar_prefetch=1,                      # seed -> SMEM
            grid=grid,
            in_specs=[
                pl.BlockSpec((ts, NE), lambda i, seed: (i, 0)),   # x tile
                pl.BlockSpec((ts, E),  lambda i, seed: (i, 0)),   # pe tile
            ],
            out_specs=pl.BlockSpec((ts, NE), lambda i, seed: (i, 0)),
        ),
        compiler_params=pltpu.CompilerParams(
            dimension_semantics=("parallel",),          # independent tiles -> megacore
            vmem_limit_bytes=32 * 1024 * 1024,          # explicit, fits v7x budget
        ),
    )(seed_arr, x2, pe_slice)
    return out2.reshape(S, N, E)


if __name__ == "__main__":
    key = jax.random.PRNGKey(0)

    # Small shapes consistent with the module: seq=8, batch=2, d_model=32.
    S, N, E = 8, 2, 32
    x = jax.random.normal(key, (S, N, E), dtype=jnp.float32)
    pe = make_pe_table(d_model=E, max_len=5000)

    # Eval-mode check (dropout is identity): kernel == pure-JAX reference.
    y_eval = positional_encoding_forward(x, pe, training=False)
    ref = x + pe[:S]
    assert jnp.allclose(jax.block_until_ready(y_eval), ref, atol=1e-6), "eval mismatch"

    # Training mode: every output element must be either 0 (dropped) or the
    # inverted-scaled value (x+pe)/0.8.
    # TODO(synk): torch's dropout RNG stream is not reproducible bit-for-bit;
    # the mask here comes from an in-kernel counter-based hash with the same
    # Bernoulli(0.8)/inverted-scaling semantics.
    y_tr = jax.block_until_ready(positional_encoding_forward(x, pe, seed=0, training=True))
    scaled = ref / (1.0 - DROPOUT_P)
    ok = jnp.isclose(y_tr, 0.0, atol=1e-6) | jnp.isclose(y_tr, scaled, rtol=1e-5, atol=1e-5)
    assert bool(jnp.all(ok)), "training-mode values not in {0, scaled}"

    # Larger shape exercises the multi-tile pipelined / parallel-grid path.
    S2, N2, E2 = 512, 4, 128
    x_big = jax.random.normal(jax.random.PRNGKey(0), (S2, N2, E2), dtype=jnp.float32)
    pe_big = make_pe_table(d_model=E2, max_len=1024)

    y_big_eval = positional_encoding_forward(x_big, pe_big, training=False)
    assert jnp.allclose(jax.block_until_ready(y_big_eval), x_big + pe_big[:S2], atol=1e-5)

    y_big_tr = jax.block_until_ready(
        positional_encoding_forward(x_big, pe_big, seed=123, training=True))
    frac_kept = float(jnp.mean((y_big_tr != 0.0).astype(jnp.float32)))
    assert 0.7 < frac_kept < 0.9, f"keep fraction {frac_kept} far from 0.8"

    print("KERNEL_OK")
</pallas_src>

<mosaic_0001>
module attributes {stable_mosaic.version = 11 : i64} {
  func.func @_pe_dropout_kernel(%arg0: i32, %arg1: memref<1xi32, #tpu.memory_space<smem>>, %arg2: memref<8x64xf32, #tpu.memory_space<vmem>>, %arg3: memref<8x32xf32, #tpu.memory_space<vmem>>, %arg4: memref<8x64xf32, #tpu.memory_space<vmem>>) attributes {dimension_semantics = [#tpu.dimension_semantics<parallel>], iteration_bounds = array<i64: 1>, scalar_prefetch = 1 : i64, scratch_operands = 0 : i64, tpu.core_type = #tpu.core_type<tc>, window_params = [{transform_indices = @transform_0, window_bounds = array<i64: 8, 64>}, {transform_indices = @transform_1, window_bounds = array<i64: 8, 32>}, {transform_indices = @transform_2, window_bounds = array<i64: 8, 64>}]} {
    %c0 = arith.constant 0 : index
    %c0_0 = arith.constant 0 : index
    %0 = vector.load %arg2[%c0, %c0_0] : memref<8x64xf32, #tpu.memory_space<vmem>>, vector<8x64xf32>
    %c0_1 = arith.constant 0 : index
    %c0_2 = arith.constant 0 : index
    %1 = vector.load %arg3[%c0_1, %c0_2] : memref<8x32xf32, #tpu.memory_space<vmem>>, vector<8x32xf32>
    %2 = tpu.concatenate %1, %1 in 1 : vector<8x32xf32>, vector<8x32xf32> -> vector<8x64xf32>
    %3 = arith.addf %0, %2 : vector<8x64xf32>
    %c0_3 = arith.constant 0 : index
    %c0_4 = arith.constant 0 : index
    %4 = vector.load %arg4[%c0_3, %c0_4] : memref<8x64xf32, #tpu.memory_space<vmem>>, vector<8x64xf32>
    tpu.vector_store %arg4[%c0_3, %c0_4], %3 {strides = array<i32>} : memref<8x64xf32, #tpu.memory_space<vmem>>, vector<8x64xf32>,
    return
  }
  func.func @transform_0(%arg0: i32, %arg1: memref<1xi32, #tpu.memory_space<smem>>) -> (i32, i32) {
    %c0_i32 = arith.constant 0 : i32
    %c0_i32_0 = arith.constant 0 : i32
    return %arg0, %c0_i32 : i32, i32
  }
  func.func @transform_1(%arg0: i32, %arg1: memref<1xi32, #tpu.memory_space<smem>>) -> (i32, i32) {
    %c0_i32 = arith.constant 0 : i32
    %c0_i32_0 = arith.constant 0 : i32
    return %arg0, %c0_i32 : i32, i32
  }
  func.func @transform_2(%arg0: i32, %arg1: memref<1xi32, #tpu.memory_space<smem>>) -> (i32, i32) {
    %c0_i32 = arith.constant 0 : i32
    %c0_i32_0 = arith.constant 0 : i32
    return %arg0, %c0_i32 : i32, i32
  }
}

</mosaic_0001>

<llo_original>
// kernel: tpu_custom_call.1
$region0: #{tpu_custom_call.1}
  #allocation0 [shape = 'u32[]', space=smem, size = 0x4, offset = 0x4, fixed_abs, tag = 'smem constant byte address 0x4 - core index']
  #allocation1 [shape = 'u32[144,128]{1,0:T(1,128)}', space=vmem, size = 0x12000, scoped, tag = 'internal scratch']
  #allocation2 [shape = 's32[1]{0}', space=sflag, size = 0x4, scoped, tag = 'scoped memory for tpu_custom_call.1']
  #allocation3 [shape = 's32[1]{0:T(128)S(6)}', space=smem, size = 0x200, scoped, tag = 'prefetched SMEM operand 0']
  %s0 = inlined_call_operand.<no memory space> [shape: s32[1], index: 0, kind: input, shape index: {}]
  %s1 = inlined_call_operand.hbm [shape: f32[8,64], index: 1, kind: input, shape index: {}]
  %s2 = inlined_call_operand.hbm [shape: f32[8,32], index: 2, kind: input, shape index: {}]
  %s3 = inlined_call_operand.hbm [shape: f32[8,64], index: 3, kind: output, shape index: {}]
  %s4 = sld [smem:[#allocation0]]
  $region26: #{tpu_custom_call.1} parent=0
    _
  %s6 = ssub.s32 1, %s4
  %s7 = scalar_select 0, %s6, %s4
  %8 = sst [smem:[#allocation3]] %s0
  $region1: #{tpu_custom_call.1} parent=0
    #allocation4 [shape = 'u8[4096]{0}', space=vmem, size = 0x1000, scoped, tag = 'input window, operand 1, single buffered']
    #allocation5 [shape = 's32[1]{0}', space=sflag, size = 0x4, scoped, tag = 'scoped memory for tpu_custom_call.1']
    #allocation6 [shape = 's32[1]{0}', space=sflag, size = 0x4, scoped, tag = 'scoped memory for tpu_custom_call.1']
    #allocation7 [shape = 'u8[4096]{0}', space=vmem, size = 0x1000, scoped, tag = 'input window, operand 2, single buffered']
    #allocation8 [shape = 's32[1]{0}', space=sflag, size = 0x4, scoped, tag = 'scoped memory for tpu_custom_call.1']
    #allocation9 [shape = 'u8[4096]{0}', space=vmem, size = 0x1000, scoped, tag = 'output window, operand 0, single buffered']
    %9 = vsyncpa [#allocation5], 0
    %10 = vsyncpa [#allocation8], 0
    %11 = vsyncpa [#allocation6], 0
    // Predicated region
    $region2: #{tpu_custom_call.1} parent=1 // pred_check
      _
    $region3: #{tpu_custom_call.1} parent=1 // pred_check_branch
      %13 = sbr.rel (0) target = $region5
    $region4: #{tpu_custom_call.1} parent=1 // pred_region
      %s15 = ssub.s32 128, 128
      %16 = vsyncadd [#allocation5], %s15
      %s18 = sshll.u32 [#allocation4], 4
      %s19 = int_to_ptr.vmem [resolvable:$true] %s18
      %21 = dma.hbm_to_vmem [thread:$0]  %s1, 128, %s19, [#allocation5]
    $region5: #{tpu_custom_call.1} parent=1 // pred_fallthru
      _
    // Predicated region
    $region6: #{tpu_custom_call.1} parent=1 // pred_check
      _
    $region7: #{tpu_custom_call.1} parent=1 // pred_check_branch
      %23 = sbr.rel (0) target = $region9
    $region8: #{tpu_custom_call.1} parent=1 // pred_region
      %s25 = ssub.s32 128, 128
      %26 = vsyncadd [#allocation8], %s25
      %s28 = sshll.u32 [#allocation7], 4
      %s29 = int_to_ptr.vmem [resolvable:$true] %s28
      %31 = dma.hbm_to_vmem [thread:$0]  %s2, 128, %s29, [#allocation8]
    $region9: #{tpu_custom_call.1} parent=1 // pred_fallthru
      _
    // Predicated region
    $region10: #{tpu_custom_call.1} parent=1 // pred_check
      _
    $region11: #{tpu_custom_call.1} parent=1 // pred_check_branch
      %33 = sbr.rel (0) target = $region13
    $region12: #{tpu_custom_call.1} parent=1 // pred_region
      %34 = dma.done [#allocation5], 128
    $region13: #{tpu_custom_call.1} parent=1 // pred_fallthru
      _
    // Predicated region
    $region14: #{tpu_custom_call.1} parent=1 // pred_check
      _
    $region15: #{tpu_custom_call.1} parent=1 // pred_check_branch
      %36 = sbr.rel (0) target = $region17
    $region16: #{tpu_custom_call.1} parent=1 // pred_region
      %37 = dma.done [#allocation8], 128
    $region17: #{tpu_custom_call.1} parent=1 // pred_fallthru
      _
    %v38 = vld [vmem:[#allocation4] sm:$0xff]
    %v39 = vld [vmem:[#allocation7] sm:$0xff]
    %41 = vrot.lane.b32.xlu0 %v39, 32
    %v42 = vpop.permute.xlu0 %41
    %vm44 = vcmask 261120
    %v45 = vsel %vm44, %v39, %v42
    %v46 = vadd.f32 %v38, %v45
    %vm47 = vcmask 523264
    %48 = vst.msk [vmem:[#allocation9] sm:$0xff] %vm47, %v46
    // Predicated region
    $region18: #{tpu_custom_call.1} parent=1 // pred_check
      _
    $region19: #{tpu_custom_call.1} parent=1 // pred_check_branch
      %50 = sbr.rel (0) target = $region21
    $region20: #{tpu_custom_call.1} parent=1 // pred_region
      %s52 = ssub.s32 128, 128
      %53 = vsyncadd [#allocation6], %s52
      %s55 = sshll.u32 [#allocation9], 4
      %s56 = int_to_ptr.vmem [resolvable:$true] %s55
      %58 = dma.vmem_to_hbm [thread:$0]  %s56, 128, %s3, [#allocation6]
    $region21: #{tpu_custom_call.1} parent=1 // pred_fallthru
      _
    // Predicated region
    $region22: #{tpu_custom_call.1} parent=1 // pred_check
      _
    $region23: #{tpu_custom_call.1} parent=1 // pred_check_branch
      %60 = sbr.rel (0) target = $region25
    $region24: #{tpu_custom_call.1} parent=1 // pred_region
      %61 = dma.done [#allocation6], 128
    $region25: #{tpu_custom_call.1} parent=1 // pred_fallthru
      _
    %62 = vsyncpa [#allocation5], 1
    %63 = vsyncpa [#allocation8], 1
    %64 = vsyncpa [#allocation6], 1

</llo_original>
